<compile_context>
chip_gen: v6e
topology: v6e:2x2x1
jax: 0.10.0
libtpu: 0.0.40
codegen_flags: <defaults>
</compile_context>

<pallas_src>
import jax
import jax.numpy as jnp
from jax.experimental import pallas as pl
from jax.experimental.pallas import tpu as pltpu


def _round_up(x: int, m: int) -> int:
    return ((x + m - 1) // m) * m


def _default_tile_bytes() -> int:
    # ~2-4 MiB tiles saturate the HBM roofline; derive from VMEM capacity when
    # the query is available (v7x has only 64 MiB physical VMEM per TC).
    try:
        info = pltpu.get_tpu_info()
        vmem_cap = int(getattr(info, "vmem_capacity_bytes", 64 << 20))
        return int(max(1 << 20, min(4 << 20, vmem_cap // 16)))
    except Exception:
        return 4 << 20


def linreg_kernel(w_ref, b_ref, x_ref, o_ref):
    # w_ref, b_ref: float32 SMEM scalars (shape (1,)); x_ref/o_ref: VMEM tiles.
    w = w_ref[0]
    b = b_ref[0]
    y = w * x_ref[...].astype(jnp.float32) + b
    o_ref[...] = y.astype(o_ref.dtype)


def linear_regression(x: jax.Array, weight: jax.Array, bias: jax.Array,
                      *, donate_x: bool = False) -> jax.Array:
    """y = weight * x + bias (scalar weight/bias broadcast over any-shape x)."""
    # Match PyTorch promotion: float32 parameter * integer tensor -> float32.
    if not jnp.issubdtype(x.dtype, jnp.floating):
        x = x.astype(jnp.float32)

    orig_shape = x.shape
    dtype = x.dtype
    itemsize = jnp.dtype(dtype).itemsize
    sublane = {4: 8, 2: 16, 1: 32}.get(itemsize, 8)

    w32 = weight.astype(jnp.float32).reshape(-1)
    b32 = bias.astype(jnp.float32).reshape(-1)

    n = x.size
    # Tiny-input fast path: launch + plumbing would dominate; let XLA fuse it.
    if n * itemsize < (64 << 10):
        return (w32[0] * x.astype(jnp.float32) + b32[0]).astype(dtype)

    tile_bytes = _default_tile_bytes()
    # Largest lane such that one sublane row-group still fits the tile budget.
    lane_cap = max(128, ((tile_bytes // (sublane * itemsize)) // 128) * 128)

    flat = x.reshape(-1)                          # contiguous reshape: no copy

    # ---- choose a lane-dense 2-D view, avoiding pad/slice copies if possible.
    padded_path = False
    if n % 128 == 0:
        last = orig_shape[-1] if len(orig_shape) >= 1 else n
        if last > 0 and last % 128 == 0 and last <= lane_cap and n % last == 0:
            lane = int(last)                      # natural last dim, a view
        else:
            lane = 128
            for cand in (4096, 2048, 1024, 512, 256, 128):
                if cand <= lane_cap and n % cand == 0:
                    lane = cand
                    break
        rows = n // lane
        x2d = flat.reshape(rows, lane)            # still a view, no HBM copy
    else:
        # Fallback for unaligned sizes: minimal pad to a 128-lane multiple.
        padded_path = True
        lane = 128
        rows = pl.cdiv(n, lane)
        flat = jnp.pad(flat, (0, rows * lane - n))
        x2d = flat.reshape(rows, lane)

    # ---- balanced row tiling.
    max_tile_rows = max(sublane,
                        ((tile_bytes // (lane * itemsize)) // sublane) * sublane)
    num_tiles = pl.cdiv(rows, max_tile_rows)
    # Guarantee >= 2 (even) grid steps for non-tiny inputs so the "parallel"
    # grid axis shards across both TensorCores on v7x.
    if rows > 2 * sublane:
        num_tiles = max(num_tiles, 2)
    if num_tiles > 1:
        num_tiles += num_tiles % 2                # even split across 2 TCs
        tile_rows = _round_up(pl.cdiv(rows, num_tiles), sublane)
        num_tiles = pl.cdiv(rows, tile_rows)      # ragged last tile is masked
    else:
        tile_rows = rows                          # single tile == full dims

    grid = (num_tiles,)
    tile_nbytes = tile_rows * lane * itemsize
    # 2 buffers x (input tile + output tile) + headroom; stays well under the
    # v7x 32 MiB scoped / 64 MiB physical VMEM.
    vmem_bytes = min(32 << 20, max(16 << 20, 4 * tile_nbytes + (2 << 20)))

    kwargs = {}
    if donate_x and not padded_path:
        # Only when the caller truly donates x; otherwise XLA adds a copy.
        kwargs["input_output_aliases"] = {2: 0}

    y2d = pl.pallas_call(
        linreg_kernel,
        out_shape=jax.ShapeDtypeStruct((rows, lane), dtype),
        grid=grid,
        in_specs=[
            pl.BlockSpec(memory_space=pltpu.MemorySpace.SMEM),   # weight (1,) f32
            pl.BlockSpec(memory_space=pltpu.MemorySpace.SMEM),   # bias   (1,) f32
            pl.BlockSpec((tile_rows, lane), lambda i: (i, 0)),   # x tile
        ],
        out_specs=pl.BlockSpec((tile_rows, lane), lambda i: (i, 0)),
        compiler_params=pltpu.CompilerParams(
            dimension_semantics=("parallel",),
            vmem_limit_bytes=vmem_bytes,
        ),
        cost_estimate=pl.CostEstimate(
            flops=2 * rows * lane,
            transcendentals=0,
            bytes_accessed=2 * rows * lane * itemsize,
        ),
        **kwargs,
    )(w32, b32, x2d)

    if padded_path:
        return y2d.reshape(-1)[:n].reshape(orig_shape)
    return y2d.reshape(orig_shape)


if __name__ == "__main__":
    key = jax.random.PRNGKey(0)
    k_w, k_b, k_x1, k_x2, k_x3 = jax.random.split(key, 5)

    # Parameters matching nn.Parameter(torch.randn(1)).
    weight = jax.random.normal(k_w, (1,), dtype=jnp.float32)
    bias = jax.random.normal(k_b, (1,), dtype=jnp.float32)

    # 1) Medium, 128-aligned input -> copy-free Pallas path, >=2 grid steps.
    x_main = jax.random.normal(k_x1, (128, 512), dtype=jnp.float32)
    y_main = jax.block_until_ready(linear_regression(x_main, weight, bias))
    ref_main = weight[0] * x_main + bias[0]
    assert y_main.shape == x_main.shape and y_main.dtype == x_main.dtype
    assert jnp.allclose(y_main, ref_main, atol=1e-6, rtol=1e-6)

    # 2) Tiny input -> plain-JAX fast path (no kernel launch overhead).
    x_small = jax.random.normal(k_x2, (16, 100), dtype=jnp.float32)
    y_small = jax.block_until_ready(linear_regression(x_small, weight, bias))
    assert jnp.allclose(y_small, weight[0] * x_small + bias[0],
                        atol=1e-6, rtol=1e-6)

    # 3) Medium, unaligned input -> pad-fallback path through the kernel.
    x_odd = jax.random.normal(k_x3, (300, 123), dtype=jnp.float32)
    y_odd = jax.block_until_ready(linear_regression(x_odd, weight, bias))
    assert y_odd.shape == x_odd.shape
    assert jnp.allclose(y_odd, weight[0] * x_odd + bias[0],
                        atol=1e-6, rtol=1e-6)

    print("KERNEL_OK")
</pallas_src>

<mosaic_0001>
module attributes {stable_mosaic.version = 11 : i64} {
  func.func @linreg_kernel(%arg0: i32, %arg1: memref<1xf32, #tpu.memory_space<smem>>, %arg2: memref<1xf32, #tpu.memory_space<smem>>, %arg3: memref<64x512xf32, #tpu.memory_space<vmem>>, %arg4: memref<64x512xf32, #tpu.memory_space<vmem>>) attributes {dimension_semantics = [#tpu.dimension_semantics<parallel>], iteration_bounds = array<i64: 2>, scalar_prefetch = 0 : i64, scratch_operands = 0 : i64, tpu.core_type = #tpu.core_type<tc>, window_params = [{transform_indices = @transform_0, window_bounds = array<i64: 1>}, {transform_indices = @transform_1, window_bounds = array<i64: 1>}, {transform_indices = @transform_2, window_bounds = array<i64: 64, 512>}, {transform_indices = @transform_3, window_bounds = array<i64: 64, 512>}]} {
    %c0 = arith.constant 0 : index
    %0 = memref.load %arg1[%c0] : memref<1xf32, #tpu.memory_space<smem>>
    %c0_0 = arith.constant 0 : index
    %1 = memref.load %arg2[%c0_0] : memref<1xf32, #tpu.memory_space<smem>>
    %c0_1 = arith.constant 0 : index
    %c0_2 = arith.constant 0 : index
    %2 = vector.load %arg3[%c0_1, %c0_2] : memref<64x512xf32, #tpu.memory_space<vmem>>, vector<64x512xf32>
    %3 = vector.broadcast %0 : f32 to vector<64x512xf32>
    %4 = arith.mulf %3, %2 : vector<64x512xf32>
    %5 = vector.broadcast %1 : f32 to vector<64x512xf32>
    %6 = arith.addf %4, %5 : vector<64x512xf32>
    %c0_3 = arith.constant 0 : index
    %c0_4 = arith.constant 0 : index
    %7 = vector.load %arg4[%c0_3, %c0_4] : memref<64x512xf32, #tpu.memory_space<vmem>>, vector<64x512xf32>
    tpu.vector_store %arg4[%c0_3, %c0_4], %6 {strides = array<i32>} : memref<64x512xf32, #tpu.memory_space<vmem>>, vector<64x512xf32>,
    return
  }
  func.func @transform_0(%arg0: i32) -> i32 {
    %c0_i32 = arith.constant 0 : i32
    %c0_i32_0 = arith.constant 0 : i32
    return %c0_i32 : i32
  }
  func.func @transform_1(%arg0: i32) -> i32 {
    %c0_i32 = arith.constant 0 : i32
    %c0_i32_0 = arith.constant 0 : i32
    return %c0_i32 : i32
  }
  func.func @transform_2(%arg0: i32) -> (i32, i32) {
    %c0_i32 = arith.constant 0 : i32
    %c0_i32_0 = arith.constant 0 : i32
    return %arg0, %c0_i32 : i32, i32
  }
  func.func @transform_3(%arg0: i32) -> (i32, i32) {
    %c0_i32 = arith.constant 0 : i32
    %c0_i32_0 = arith.constant 0 : i32
    return %arg0, %c0_i32 : i32, i32
  }
}

</mosaic_0001>

<llo_original>
// kernel: tpu_custom_call.1
$region0: #{tpu_custom_call.1}
  #allocation0 [shape = 'u32[]', space=smem, size = 0x4, offset = 0x4, fixed_abs, tag = 'smem constant byte address 0x4 - core index']
  #allocation1 [shape = 'u32[144,128]{1,0:T(1,128)}', space=vmem, size = 0x12000, scoped, tag = 'internal scratch']
  #allocation2 [shape = 'f32[1]{0:T(128)S(6)}', space=smem, size = 0x200, scoped, tag = 'scoped memory for tpu_custom_call.1']
  #allocation3 [shape = 'f32[1]{0:T(128)S(6)}', space=smem, size = 0x200, scoped, tag = 'scoped memory for tpu_custom_call.1']
  %s0 = inlined_call_operand.<no memory space> [shape: f32[1], index: 0, kind: input, shape index: {}]
  %s1 = inlined_call_operand.<no memory space> [shape: f32[1], index: 1, kind: input, shape index: {}]
  %s2 = inlined_call_operand.hbm [shape: f32[128,512], index: 2, kind: input, shape index: {}]
  %s3 = inlined_call_operand.hbm [shape: f32[128,512], index: 3, kind: output, shape index: {}]
  %s4 = sld [smem:[#allocation0]]
  $region49: #{tpu_custom_call.1} parent=0
    _
  %s6 = ssub.s32 1, %s4
  %s7 = scalar_select 0, %s6, %s4
  %8 = sst [smem:[#allocation2]] %s0
  %9 = sst [smem:[#allocation3]] %s1
  $region1: #{tpu_custom_call.1} parent=0
    #allocation4 [shape = 'u8[262144]{0}', space=vmem, size = 0x40000, scoped, tag = 'input window, operand 2']
    #allocation5 [shape = 's32[2]{0}', space=sflag, size = 0x8, scoped, tag = 'scoped memory for tpu_custom_call.1']
    #allocation6 [shape = 's32[2]{0}', space=sflag, size = 0x8, scoped, tag = 'scoped memory for tpu_custom_call.1']
    #allocation7 [shape = 'u8[262144]{0}', space=vmem, size = 0x40000, scoped, tag = 'output window, operand 0']
    %10 = vsyncpa [#allocation5], 0
    %s11 = scalar_lea.sflag [#allocation5], 1
    %12 = vsyncpa %s11, 0
    %13 = vsyncpa [#allocation6], 0
    %s14 = scalar_lea.sflag [#allocation6], 1
    %15 = vsyncpa %s14, 0
    loop: start=0, step=1, limit=4
    $region2: #{tpu_custom_call.1} parent=1 // loop_pre_header
      _
    $region3: #{tpu_custom_call.1} parent=1 // loop_header
      %s17 = sphi 0, %s21
      %p18 = scmp.ge.s32.totalorder %s17, 4
      %s25 = sphi 0, %s25
      %s27 = sphi 0, %s25
      %s28 = sphi 0, %s27
      %s42 = sphi 0, %s28
      %s46 = sphi 0, %s46
      %s48 = sphi 0, %s46
      %s49 = sphi 0, %s48
      %s63 = sphi 0, %s49
      %s69 = sphi 0, %s71
      %s72 = sphi 0, %s69
      %s73 = sphi 0, %s72
      %s89 = sphi 0, %s73
      %s95 = sphi 0, %s97
      %s98 = sphi 0, %s95
      %s99 = sphi 0, %s98
      %s115 = sphi 0, %s99
    $region4: #{tpu_custom_call.1} parent=1 // loop_header_branch
      %20 = sbr.rel (%p18) target = $region8
    $region5: #{tpu_custom_call.1} parent=1 // loop_body
      %s22 = ssub.s32 %s17, 1
      %s23 = ssub.s32 %s17, 2
      %s24 = sadd.s32 %s17, 1
      %s26 = sadd.s32 %s25, 1
      %p29 = scmp.eq.s32.totalorder %s17, 1
      %p30 = scmp.ne.s32.totalorder %s25, %s27
      %p31 = scmp.eq.s32.totalorder %s17, 0
      %p32 = por %p30, %p31
      %p33 = scmp.ne.s32.totalorder %s25, %s27
      %p34 = scmp.eq.s32.totalorder %s22, 1
      %p35 = por %p33, %p34
      %p36 = scmp.ne.s32.totalorder %s27, %s28
      %p37 = scmp.eq.s32.totalorder %s22, 0
      %p38 = por %p36, %p37
      %p39 = scmp.ne.s32.totalorder %s27, %s28
      %p40 = scmp.eq.s32.totalorder %s23, 1
      %p41 = por %p39, %p40
      %p43 = scmp.ne.s32.totalorder %s28, %s42
      %p44 = scmp.eq.s32.totalorder %s23, 0
      %p45 = por %p43, %p44
      %s47 = sadd.s32 %s46, 1
      %p50 = scmp.eq.s32.totalorder %s17, 1
      %p51 = scmp.ne.s32.totalorder %s46, %s48
      %p52 = scmp.eq.s32.totalorder %s17, 0
      %p53 = por %p51, %p52
      %p54 = scmp.ne.s32.totalorder %s46, %s48
      %p55 = scmp.eq.s32.totalorder %s22, 1
      %p56 = por %p54, %p55
      %p57 = scmp.ne.s32.totalorder %s48, %s49
      %p58 = scmp.eq.s32.totalorder %s22, 0
      %p59 = por %p57, %p58
      %p60 = scmp.ne.s32.totalorder %s48, %s49
      %p61 = scmp.eq.s32.totalorder %s23, 1
      %p62 = por %p60, %p61
      %p64 = scmp.ne.s32.totalorder %s49, %s63
      %p65 = scmp.eq.s32.totalorder %s23, 0
      %p66 = por %p64, %p65
      %s67 = ssub.s32 %s17, %s24
      %p68 = scmp.eq.s32.totalorder %s67, 0
      %s70 = sadd.s32 %s69, 1
      %s71 = scalar_select %p68, %s69, %s70
      %p74 = pneg %p68
      %p75 = scmp.eq.s32.totalorder %s17, 1
      %p76 = por %p74, %p75
      %p77 = scmp.ne.s32.totalorder %s69, %s72
      %p78 = scmp.eq.s32.totalorder %s17, 0
      %p79 = por %p77, %p78
      %p80 = scmp.ne.s32.totalorder %s69, %s72
      %p81 = scmp.eq.s32.totalorder %s22, 1
      %p82 = por %p80, %p81
      %p83 = scmp.ne.s32.totalorder %s72, %s73
      %p84 = scmp.eq.s32.totalorder %s22, 0
      %p85 = por %p83, %p84
      %p86 = scmp.ne.s32.totalorder %s72, %s73
      %p87 = scmp.eq.s32.totalorder %s23, 1
      %p88 = por %p86, %p87
      %p90 = scmp.ne.s32.totalorder %s73, %s89
      %p91 = scmp.eq.s32.totalorder %s23, 0
      %p92 = por %p90, %p91
      %s93 = ssub.s32 %s17, %s24
      %p94 = scmp.eq.s32.totalorder %s93, 0
      %s96 = sadd.s32 %s95, 1
      %s97 = scalar_select %p94, %s95, %s96
      %p100 = pneg %p94
      %p101 = scmp.eq.s32.totalorder %s17, 1
      %p102 = por %p100, %p101
      %p103 = scmp.ne.s32.totalorder %s95, %s98
      %p104 = scmp.eq.s32.totalorder %s17, 0
      %p105 = por %p103, %p104
      %p106 = scmp.ne.s32.totalorder %s95, %s98
      %p107 = scmp.eq.s32.totalorder %s22, 1
      %p108 = por %p106, %p107
      %p109 = scmp.ne.s32.totalorder %s98, %s99
      %p110 = scmp.eq.s32.totalorder %s22, 0
      %p111 = por %p109, %p110
      %p112 = scmp.ne.s32.totalorder %s98, %s99
      %p113 = scmp.eq.s32.totalorder %s23, 1
      %p114 = por %p112, %p113
      %p116 = scmp.ne.s32.totalorder %s99, %s115
      %p117 = scmp.eq.s32.totalorder %s23, 0
      %p118 = por %p116, %p117
      %p119 = scmp.le.s32.totalorder 1, %s17
      %p120 = scmp.lt.s32.totalorder %s17, 3
      %p121 = pnand %p119, %p120
      %p122 = pneg %p121
      // Predicated region
      $region9: #{tpu_custom_call.1} parent=5 // pred_check
        _
      $region10: #{tpu_custom_call.1} parent=5 // pred_check_branch
        %124 = sbr.rel (%p121) target = $region12
      $region11: #{tpu_custom_call.1} parent=5 // pred_region
        %s125 = ssub.s32 %s17, 1
        // Predicated region
        $region13: #{tpu_custom_call.1} parent=11 // pred_check
          %p126 = pneg %p38
        $region14: #{tpu_custom_call.1} parent=11 // pred_check_branch
          %128 = sbr.rel (%p126) target = $region16
        $region15: #{tpu_custom_call.1} parent=11 // pred_region
          _
        $region16: #{tpu_custom_call.1} parent=11 // pred_fallthru
          _
        // Predicated region
        $region17: #{tpu_custom_call.1} parent=11 // pred_check
          %p129 = pneg %p59
        $region18: #{tpu_custom_call.1} parent=11 // pred_check_branch
          %131 = sbr.rel (%p129) target = $region20
        $region19: #{tpu_custom_call.1} parent=11 // pred_region
          _
        $region20: #{tpu_custom_call.1} parent=11 // pred_fallthru
          _
      $region12: #{tpu_custom_call.1} parent=5 // pred_fallthru
        _
      %p132 = scmp.lt.s32.totalorder %s17, 2
      // Predicated region
      $region21: #{tpu_custom_call.1} parent=5 // pred_check
        %p133 = pneg %p132
      $region22: #{tpu_custom_call.1} parent=5 // pred_check_branch
        %135 = sbr.rel (%p133) target = $region24
      $region23: #{tpu_custom_call.1} parent=5 // pred_region
        // Predicated region
        $region25: #{tpu_custom_call.1} parent=23 // pred_check
          %p136 = pneg %p79
        $region26: #{tpu_custom_call.1} parent=23 // pred_check_branch
          %138 = sbr.rel (%p136) target = $region28
        $region27: #{tpu_custom_call.1} parent=23 // pred_region
          %s139 = sand.u32 %s69, 1
          %s140 = scalar_lea.sflag [#allocation5], %s139
          %s141 = sand.u32 %s69, 1
          %s142 = smul.addr %s141, 256
          %s143 = scalar_lea.vmem [#allocation4], %s142
          %s144 = smul.u32 8, %s17
          %s146 = ssub.s32 4096, 4096
          %147 = vsyncadd %s140, %s146
          %s148 = smul.addr %s144, 4
          %s149 = smul.addr %s148, 128
          %s150 = scalar_lea.hbm %s2, %s149
          %s151 = sshll.u32 %s143, 4
          %s152 = int_to_ptr.vmem [resolvable:$true] %s151
          %157 = dma.hbm_to_vmem [thread:$0]  %s150, 4096, %s152, %s140, 512, 512, 32
        $region28: #{tpu_custom_call.1} parent=23 // pred_fallthru
          _
      $region24: #{tpu_custom_call.1} parent=5 // pred_fallthru
        _
      %p158 = scmp.le.s32.totalorder 1, %s17
      %p159 = scmp.lt.s32.totalorder %s17, 3
      %p160 = pnand %p158, %p159
      %p161 = pneg %p160
      // Predicated region
      $region29: #{tpu_custom_call.1} parent=5 // pred_check
        _
      $region30: #{tpu_custom_call.1} parent=5 // pred_check_branch
        %163 = sbr.rel (%p160) target = $region32
      $region31: #{tpu_custom_call.1} parent=5 // pred_region
        %s164 = ssub.s32 %s17, 1
        %s165 = sand.u32 %s72, 1
        %s166 = scalar_lea.sflag [#allocation5], %s165
        %s167 = sand.u32 %s72, 1
        %s168 = smul.addr %s167, 256
        %s169 = scalar_lea.vmem [#allocation4], %s168
        // Predicated region
        $region33: #{tpu_custom_call.1} parent=31 // pred_check
          %p170 = pneg %p85
        $region34: #{tpu_custom_call.1} parent=31 // pred_check_branch
          %172 = sbr.rel (%p170) target = $region36
        $region35: #{tpu_custom_call.1} parent=31 // pred_region
          %173 = dma.done %s166, 4096
        $region36: #{tpu_custom_call.1} parent=31 // pred_fallthru
          _
        %p174 = pneg %p38
        %p175 = pneg %p35
        %p176 = pneg %p59
        %p177 = pneg %p56
        %s178 = sand.u32 %s72, 1
        %s179 = scalar_lea.sflag [#allocation5], %s178
        %s180 = sand.u32 %s72, 1
        %s181 = smul.addr %s180, 256
        %s182 = scalar_lea.vmem [#allocation4], %s181
        %p183 = pneg %p85
        %p184 = pneg %p82
        %p185 = pneg %p111
        %p186 = pneg %p108
        %s187 = sand.u32 %s98, 1
        %s188 = scalar_lea.sflag [#allocation6], %s187
        %s189 = sand.u32 %s98, 1
        %s190 = smul.addr %s189, 256
        %s191 = scalar_lea.vmem [#allocation7], %s190
        %s192 = smul.u32 8, %s22
        %s193 = smul.u32 8, %s22
        %s194 = sld [smem:[#allocation2]]
        %s195 = sld [smem:[#allocation3]]
        %v196 = vld [vmem:[%s169] sm:$0xff]
        %v197 = vld [vmem:[%s169 + $0x8] sm:$0xff]
        %v198 = vld [vmem:[%s169 + $0x10] sm:$0xff]
        %v199 = vld [vmem:[%s169 + $0x18] sm:$0xff]
        %v200 = vld [vmem:[%s169 + $0x20] sm:$0xff]
        %v201 = vld [vmem:[%s169 + $0x28] sm:$0xff]
        %v202 = vld [vmem:[%s169 + $0x30] sm:$0xff]
        %v203 = vld [vmem:[%s169 + $0x38] sm:$0xff]
        %v204 = vld [vmem:[%s169 + $0x40] sm:$0xff]
        %v205 = vld [vmem:[%s169 + $0x48] sm:$0xff]
        %v206 = vld [vmem:[%s169 + $0x50] sm:$0xff]
        %v207 = vld [vmem:[%s169 + $0x58] sm:$0xff]
        %v208 = vld [vmem:[%s169 + $0x60] sm:$0xff]
        %v209 = vld [vmem:[%s169 + $0x68] sm:$0xff]
        %v210 = vld [vmem:[%s169 + $0x70] sm:$0xff]
        %v211 = vld [vmem:[%s169 + $0x78] sm:$0xff]
        %v212 = vld [vmem:[%s169 + $0x80] sm:$0xff]
        %v213 = vld [vmem:[%s169 + $0x88] sm:$0xff]
        %v214 = vld [vmem:[%s169 + $0x90] sm:$0xff]
        %v215 = vld [vmem:[%s169 + $0x98] sm:$0xff]
        %v216 = vld [vmem:[%s169 + $0xa0] sm:$0xff]
        %v217 = vld [vmem:[%s169 + $0xa8] sm:$0xff]
        %v218 = vld [vmem:[%s169 + $0xb0] sm:$0xff]
        %v219 = vld [vmem:[%s169 + $0xb8] sm:$0xff]
        %v220 = vld [vmem:[%s169 + $0xc0] sm:$0xff]
        %v221 = vld [vmem:[%s169 + $0xc8] sm:$0xff]
        %v222 = vld [vmem:[%s169 + $0xd0] sm:$0xff]
        %v223 = vld [vmem:[%s169 + $0xd8] sm:$0xff]
        %v224 = vld [vmem:[%s169 + $0xe0] sm:$0xff]
        %v225 = vld [vmem:[%s169 + $0xe8] sm:$0xff]
        %v226 = vld [vmem:[%s169 + $0xf0] sm:$0xff]
        %v227 = vld [vmem:[%s169 + $0xf8] sm:$0xff]
        %v228 = vstv %s194
        %v229 = vmul.f32 %v228, %v196
        %v230 = vmul.f32 %v228, %v197
        %v231 = vmul.f32 %v228, %v198
        %v232 = vmul.f32 %v228, %v199
        %v233 = vmul.f32 %v228, %v200
        %v234 = vmul.f32 %v228, %v201
        %v235 = vmul.f32 %v228, %v202
        %v236 = vmul.f32 %v228, %v203
        %v237 = vmul.f32 %v228, %v204
        %v238 = vmul.f32 %v228, %v205
        %v239 = vmul.f32 %v228, %v206
        %v240 = vmul.f32 %v228, %v207
        %v241 = vmul.f32 %v228, %v208
        %v242 = vmul.f32 %v228, %v209
        %v243 = vmul.f32 %v228, %v210
        %v244 = vmul.f32 %v228, %v211
        %v245 = vmul.f32 %v228, %v212
        %v246 = vmul.f32 %v228, %v213
        %v247 = vmul.f32 %v228, %v214
        %v248 = vmul.f32 %v228, %v215
        %v249 = vmul.f32 %v228, %v216
        %v250 = vmul.f32 %v228, %v217
        %v251 = vmul.f32 %v228, %v218
        %v252 = vmul.f32 %v228, %v219
        %v253 = vmul.f32 %v228, %v220
        %v254 = vmul.f32 %v228, %v221
        %v255 = vmul.f32 %v228, %v222
        %v256 = vmul.f32 %v228, %v223
        %v257 = vmul.f32 %v228, %v224
        %v258 = vmul.f32 %v228, %v225
        %v259 = vmul.f32 %v228, %v226
        %v260 = vmul.f32 %v228, %v227
        %v261 = vstv %s195
        %v262 = vadd.f32 %v229, %v261
        %v263 = vadd.f32 %v230, %v261
        %v264 = vadd.f32 %v231, %v261
        %v265 = vadd.f32 %v232, %v261
        %v266 = vadd.f32 %v233, %v261
        %v267 = vadd.f32 %v234, %v261
        %v268 = vadd.f32 %v235, %v261
        %v269 = vadd.f32 %v236, %v261
        %v270 = vadd.f32 %v237, %v261
        %v271 = vadd.f32 %v238, %v261
        %v272 = vadd.f32 %v239, %v261
        %v273 = vadd.f32 %v240, %v261
        %v274 = vadd.f32 %v241, %v261
        %v275 = vadd.f32 %v242, %v261
        %v276 = vadd.f32 %v243, %v261
        %v277 = vadd.f32 %v244, %v261
        %v278 = vadd.f32 %v245, %v261
        %v279 = vadd.f32 %v246, %v261
        %v280 = vadd.f32 %v247, %v261
        %v281 = vadd.f32 %v248, %v261
        %v282 = vadd.f32 %v249, %v261
        %v283 = vadd.f32 %v250, %v261
        %v284 = vadd.f32 %v251, %v261
        %v285 = vadd.f32 %v252, %v261
        %v286 = vadd.f32 %v253, %v261
        %v287 = vadd.f32 %v254, %v261
        %v288 = vadd.f32 %v255, %v261
        %v289 = vadd.f32 %v256, %v261
        %v290 = vadd.f32 %v257, %v261
        %v291 = vadd.f32 %v258, %v261
        %v292 = vadd.f32 %v259, %v261
        %v293 = vadd.f32 %v260, %v261
        %294 = vst [vmem:[%s191] sm:$0xff] %v262
        %295 = vst [vmem:[%s191 + $0x8] sm:$0xff] %v263
        %296 = vst [vmem:[%s191 + $0x10] sm:$0xff] %v264
        %297 = vst [vmem:[%s191 + $0x18] sm:$0xff] %v265
        %298 = vst [vmem:[%s191 + $0x20] sm:$0xff] %v266
        %299 = vst [vmem:[%s191 + $0x28] sm:$0xff] %v267
        %300 = vst [vmem:[%s191 + $0x30] sm:$0xff] %v268
        %301 = vst [vmem:[%s191 + $0x38] sm:$0xff] %v269
        %302 = vst [vmem:[%s191 + $0x40] sm:$0xff] %v270
        %303 = vst [vmem:[%s191 + $0x48] sm:$0xff] %v271
        %304 = vst [vmem:[%s191 + $0x50] sm:$0xff] %v272
        %305 = vst [vmem:[%s191 + $0x58] sm:$0xff] %v273
        %306 = vst [vmem:[%s191 + $0x60] sm:$0xff] %v274
        %307 = vst [vmem:[%s191 + $0x68] sm:$0xff] %v275
        %308 = vst [vmem:[%s191 + $0x70] sm:$0xff] %v276
        %309 = vst [vmem:[%s191 + $0x78] sm:$0xff] %v277
        %310 = vst [vmem:[%s191 + $0x80] sm:$0xff] %v278
        %311 = vst [vmem:[%s191 + $0x88] sm:$0xff] %v279
        %312 = vst [vmem:[%s191 + $0x90] sm:$0xff] %v280
        %313 = vst [vmem:[%s191 + $0x98] sm:$0xff] %v281
        %314 = vst [vmem:[%s191 + $0xa0] sm:$0xff] %v282
        %315 = vst [vmem:[%s191 + $0xa8] sm:$0xff] %v283
        %316 = vst [vmem:[%s191 + $0xb0] sm:$0xff] %v284
        %317 = vst [vmem:[%s191 + $0xb8] sm:$0xff] %v285
        %318 = vst [vmem:[%s191 + $0xc0] sm:$0xff] %v286
        %319 = vst [vmem:[%s191 + $0xc8] sm:$0xff] %v287
        %320 = vst [vmem:[%s191 + $0xd0] sm:$0xff] %v288
        %321 = vst [vmem:[%s191 + $0xd8] sm:$0xff] %v289
        %322 = vst [vmem:[%s191 + $0xe0] sm:$0xff] %v290
        %323 = vst [vmem:[%s191 + $0xe8] sm:$0xff] %v291
        %324 = vst [vmem:[%s191 + $0xf0] sm:$0xff] %v292
        %325 = vst [vmem:[%s191 + $0xf8] sm:$0xff] %v293
        %s326 = sand.u32 %s98, 1
        %s327 = scalar_lea.sflag [#allocation6], %s326
        %s328 = sand.u32 %s98, 1
        %s329 = smul.addr %s328, 256
        %s330 = scalar_lea.vmem [#allocation7], %s329
        // Predicated region
        $region37: #{tpu_custom_call.1} parent=31 // pred_check
          %p331 = pneg %p108
        $region38: #{tpu_custom_call.1} parent=31 // pred_check_branch
          %333 = sbr.rel (%p331) target = $region40
        $region39: #{tpu_custom_call.1} parent=31 // pred_region
          %s334 = smul.u32 8, %s22
          %s336 = ssub.s32 4096, 4096
          %337 = vsyncadd %s327, %s336
          %s338 = smul.addr %s334, 4
          %s339 = smul.addr %s338, 128
          %s340 = scalar_lea.hbm %s3, %s339
          %s341 = sshll.u32 %s330, 4
          %s342 = int_to_ptr.vmem [resolvable:$true] %s341
          %347 = dma.vmem_to_hbm [thread:$0]  %s342, 4096, %s340, %s327, 512, 512, 32
        $region40: #{tpu_custom_call.1} parent=31 // pred_fallthru
          _
      $region32: #{tpu_custom_call.1} parent=5 // pred_fallthru
        _
      %p348 = scmp.le.s32.totalorder 2, %s17
      // Predicated region
      $region41: #{tpu_custom_call.1} parent=5 // pred_check
        %p349 = pneg %p348
      $region42: #{tpu_custom_call.1} parent=5 // pred_check_branch
        %351 = sbr.rel (%p349) target = $region44
      $region43: #{tpu_custom_call.1} parent=5 // pred_region
        %s352 = ssub.s32 %s17, 2
        // Predicated region
        $region45: #{tpu_custom_call.1} parent=43 // pred_check
          %p353 = pneg %p114
        $region46: #{tpu_custom_call.1} parent=43 // pred_check_branch
          %355 = sbr.rel (%p353) target = $region48
        $region47: #{tpu_custom_call.1} parent=43 // pred_region
          %s356 = sand.u32 %s99, 1
          %s357 = scalar_lea.sflag [#allocation6], %s356
          %s358 = sand.u32 %s99, 1
          %s359 = smul.addr %s358, 256
          %s360 = scalar_lea.vmem [#allocation7], %s359
          %361 = dma.done %s357, 4096
        $region48: #{tpu_custom_call.1} parent=43 // pred_fallthru
          _
      $region44: #{tpu_custom_call.1} parent=5 // pred_fallthru
        _
    $region6: #{tpu_custom_call.1} parent=1 // loop_footer
      %s21 = sadd.s32 1, %s17
    $region7: #{tpu_custom_call.1} parent=1 // loop_footer_branch
      %16 = sbr.rel target = $region3
    $region8: #{tpu_custom_call.1} parent=1 // loop_exit
      _
    %362 = vsyncpa [#allocation5], 1
    %s363 = scalar_lea.sflag [#allocation5], 1
    %364 = vsyncpa %s363, 1
    %365 = vsyncpa [#allocation6], 1
    %s366 = scalar_lea.sflag [#allocation6], 1
    %367 = vsyncpa %s366, 1

</llo_original>
